<compile_context>
chip_gen: v6e
topology: v6e:2x2x1
jax: 0.10.0
libtpu: 0.0.40
codegen_flags: <defaults>
</compile_context>

<pallas_src>
import functools

import jax
import jax.numpy as jnp
from jax.experimental import pallas as pl
from jax.experimental.pallas import tpu as pltpu


def _mlp_kernel(x_ref, w1_ref, b1_ref, w2_ref, b2_ref, o_ref, *, chunk):
    # x_ref:  (1, C_in, tm)   channels on sublanes, spatial on lanes
    # w1_ref: (Hid, C_in)     b1_ref: (Hid, 1)
    # w2_ref: (C_out, Hid)    b2_ref: (C_out, 1)
    # o_ref:  (1, C_out, tm)
    w1 = w1_ref[...]
    b1 = b1_ref[...]
    w2 = w2_ref[...]
    b2 = b2_ref[...]
    tm = x_ref.shape[-1]
    # Process the lane (spatial) axis in static chunks so the (Hid, chunk)
    # hidden intermediate stays register/VMEM resident (no spill round-trips
    # loading the vld/vst slots at large tm).
    for c0 in range(0, tm, chunk):
        c = min(chunk, tm - c0)
        x = x_ref[0, :, c0:c0 + c]                                    # (C_in, c)
        h = jnp.dot(w1, x, preferred_element_type=jnp.float32) + b1   # (Hid, c)
        # default MLP: no norm / activation / dropout -> straight to final linear
        o = jnp.dot(w2, h, preferred_element_type=jnp.float32) + b2   # (C_out, c)
        o_ref[0, :, c0:c0 + c] = o.astype(o_ref.dtype)


def mlp_pallas(x, w1, b1, w2, b2, *, io_budget_bytes=16 * 1024 * 1024):
    """x:  (B, C_in, D, H, W) float32 (NCDHW, dim=3, linear_dim=1).
    w1: (Hid, C_in), b1: (Hid,), w2: (C_out, Hid), b2: (C_out,)
    Returns (B, C_out, D, H, W)."""
    B, C_in, D, H, W = x.shape
    Hid = w1.shape[0]
    C_out = w2.shape[0]
    N = D * H * W

    # ---- tile sizing from a VMEM byte budget -------------------------------
    # Resident weight/bias bytes (double-buffered by the pipeline).
    weight_bytes = 2 * 4 * (Hid * C_in + Hid + C_out * Hid + C_out)
    io_budget = max(1 << 20, io_budget_bytes - weight_bytes)
    # Double-buffered f32 input + output bytes per lane column of the tile.
    per_lane = 2 * 4 * (C_in + C_out)
    tm = io_budget // per_lane
    tm = min(tm, 32768)
    tm = max(128, (tm // 128) * 128)
    if tm >= N:
        tm = N            # full-extent block: always a legal block shape
        num_tiles = 1
    else:
        num_tiles = pl.cdiv(N, tm)   # ragged last block handled by Pallas

    # Inner lane chunk: keep the (Hid, chunk) intermediate <= ~2 MiB.
    chunk = (2 * 1024 * 1024) // (4 * max(Hid, 1))
    chunk = max(128, (min(chunk, 512) // 128) * 128)
    chunk = min(chunk, tm)

    working_set = 2 * 4 * tm * (C_in + C_out) + weight_bytes
    vmem_limit = int(min(max(32 * 1024 * 1024, working_set + (8 << 20)),
                         48 * 1024 * 1024))

    # Copy-free reshape: spatial dims are already contiguous in NCDHW.
    x3d = x.reshape(B, C_in, N)
    b1c = b1.reshape(Hid, 1)
    b2c = b2.reshape(C_out, 1)

    cost = pl.CostEstimate(
        flops=2 * B * N * (C_in * Hid + Hid * C_out),
        transcendentals=0,
        bytes_accessed=4 * (B * N * (C_in + C_out)
                            + Hid * C_in + Hid + C_out * Hid + C_out),
    )

    kernel = functools.partial(_mlp_kernel, chunk=chunk)

    out3d = pl.pallas_call(
        kernel,
        out_shape=jax.ShapeDtypeStruct((B, C_out, N), x.dtype),
        grid_spec=pltpu.PrefetchScalarGridSpec(
            num_scalar_prefetch=0,
            # Tile axis leads so the v7x megacore split happens over the large
            # spatial-tile axis, not a tiny/odd batch.
            grid=(num_tiles, B),
            in_specs=[
                pl.BlockSpec((1, C_in, tm), lambda i, b: (b, 0, i)),
                pl.BlockSpec((Hid, C_in), lambda i, b: (0, 0)),
                pl.BlockSpec((Hid, 1), lambda i, b: (0, 0)),
                pl.BlockSpec((C_out, Hid), lambda i, b: (0, 0)),
                pl.BlockSpec((C_out, 1), lambda i, b: (0, 0)),
            ],
            out_specs=pl.BlockSpec((1, C_out, tm), lambda i, b: (b, 0, i)),
        ),
        compiler_params=pltpu.CompilerParams(
            dimension_semantics=("parallel", "parallel"),
            vmem_limit_bytes=vmem_limit,
        ),
        cost_estimate=cost,
    )(x3d, w1, b1c, w2, b2c)

    return out3d.reshape(B, C_out, D, H, W)


def _init_linear_params(key, out_features, in_features):
    # Deterministic init mimicking torch.nn.Linear (uniform in +-1/sqrt(fan_in)).
    kw, kb = jax.random.split(key)
    bound = 1.0 / jnp.sqrt(jnp.float32(in_features))
    w = jax.random.uniform(kw, (out_features, in_features), jnp.float32,
                           minval=-bound, maxval=bound)
    b = jax.random.uniform(kb, (out_features,), jnp.float32,
                           minval=-bound, maxval=bound)
    return w, b


if __name__ == "__main__":
    key = jax.random.PRNGKey(0)
    kx, k1, k2 = jax.random.split(key, 3)

    # Small shapes consistent with MLP(dim=3, linear_dim=1):
    B, C_in, D, H, W = 2, 4, 8, 8, 8
    Hid, C_out = 32, 8

    x = jax.random.normal(kx, (B, C_in, D, H, W), jnp.float32)
    w1, b1 = _init_linear_params(k1, Hid, C_in)    # first_layer.linear
    w2, b2 = _init_linear_params(k2, C_out, Hid)   # final_layer.linear

    out = mlp_pallas(x, w1, b1, w2, b2)
    out = jax.block_until_ready(out)

    # Pure-JAX reference check (same math as the PyTorch forward).
    x_cl = jnp.moveaxis(x, 1, -1)
    ref = x_cl @ w1.T + b1
    ref = ref @ w2.T + b2
    ref = jnp.moveaxis(ref, -1, 1)
    assert out.shape == (B, C_out, D, H, W)
    assert jnp.allclose(out, ref, atol=1e-5, rtol=1e-5)

    print("KERNEL_OK")
</pallas_src>

<mosaic_0001>
module attributes {stable_mosaic.version = 11 : i64} {
  func.func @_mlp_kernel(%arg0: i32, %arg1: i32, %arg2: memref<1x4x512xf32, #tpu.memory_space<vmem>>, %arg3: memref<32x4xf32, #tpu.memory_space<vmem>>, %arg4: memref<32x1xf32, #tpu.memory_space<vmem>>, %arg5: memref<8x32xf32, #tpu.memory_space<vmem>>, %arg6: memref<8x1xf32, #tpu.memory_space<vmem>>, %arg7: memref<1x8x512xf32, #tpu.memory_space<vmem>>) attributes {dimension_semantics = [#tpu.dimension_semantics<parallel>, #tpu.dimension_semantics<parallel>], iteration_bounds = array<i64: 1, 2>, scalar_prefetch = 0 : i64, scratch_operands = 0 : i64, tpu.core_type = #tpu.core_type<tc>, window_params = [{transform_indices = @transform_0, window_bounds = array<i64: 1, 4, 512>}, {pipeline_mode = #tpu.pipeline_mode<synchronous>, transform_indices = @transform_1, window_bounds = array<i64: 32, 4>}, {pipeline_mode = #tpu.pipeline_mode<synchronous>, transform_indices = @transform_2, window_bounds = array<i64: 32, 1>}, {pipeline_mode = #tpu.pipeline_mode<synchronous>, transform_indices = @transform_3, window_bounds = array<i64: 8, 32>}, {pipeline_mode = #tpu.pipeline_mode<synchronous>, transform_indices = @transform_4, window_bounds = array<i64: 8, 1>}, {transform_indices = @transform_5, window_bounds = array<i64: 1, 8, 512>}]} {
    %c0 = arith.constant 0 : index
    %c0_0 = arith.constant 0 : index
    %0 = vector.load %arg3[%c0, %c0_0] : memref<32x4xf32, #tpu.memory_space<vmem>>, vector<32x4xf32>
    %c0_1 = arith.constant 0 : index
    %c0_2 = arith.constant 0 : index
    %1 = vector.load %arg4[%c0_1, %c0_2] : memref<32x1xf32, #tpu.memory_space<vmem>>, vector<32x1xf32>
    %c0_3 = arith.constant 0 : index
    %c0_4 = arith.constant 0 : index
    %2 = vector.load %arg5[%c0_3, %c0_4] : memref<8x32xf32, #tpu.memory_space<vmem>>, vector<8x32xf32>
    %c0_5 = arith.constant 0 : index
    %c0_6 = arith.constant 0 : index
    %3 = vector.load %arg6[%c0_5, %c0_6] : memref<8x1xf32, #tpu.memory_space<vmem>>, vector<8x1xf32>
    %c0_7 = arith.constant 0 : index
    %c0_8 = arith.constant 0 : index
    %c0_9 = arith.constant 0 : index
    %4 = vector.load %arg2[%c0_7, %c0_8, %c0_9] : memref<1x4x512xf32, #tpu.memory_space<vmem>>, vector<1x4x512xf32>
    %5 = vector.shape_cast %4 : vector<1x4x512xf32> to vector<4x512xf32>
    %cst = arith.constant dense<0.000000e+00> : vector<32x512xf32>
    %6 = tpu.matmul %0, %5, %cst {dimension_numbers = #tpu.dot_dimension_numbers<[1], [0], [0], [1], [0, 0, 1, 1], [], []>} : vector<32x4xf32>, vector<4x512xf32>, vector<32x512xf32> -> vector<32x512xf32>
    %7 = vector.broadcast %1 : vector<32x1xf32> to vector<32x512xf32>
    %8 = arith.addf %6, %7 : vector<32x512xf32>
    %cst_10 = arith.constant dense<0.000000e+00> : vector<8x512xf32>
    %9 = tpu.matmul %2, %8, %cst_10 {dimension_numbers = #tpu.dot_dimension_numbers<[1], [0], [0], [1], [0, 0, 1, 1], [], []>} : vector<8x32xf32>, vector<32x512xf32>, vector<8x512xf32> -> vector<8x512xf32>
    %10 = vector.broadcast %3 : vector<8x1xf32> to vector<8x512xf32>
    %11 = arith.addf %9, %10 : vector<8x512xf32>
    %c0_11 = arith.constant 0 : index
    %c0_12 = arith.constant 0 : index
    %c0_13 = arith.constant 0 : index
    %12 = vector.load %arg7[%c0_11, %c0_12, %c0_13] : memref<1x8x512xf32, #tpu.memory_space<vmem>>, vector<1x8x512xf32>
    %13 = vector.shape_cast %12 : vector<1x8x512xf32> to vector<8x512xf32>
    %14 = vector.shape_cast %11 : vector<8x512xf32> to vector<1x8x512xf32>
    tpu.vector_store %arg7[%c0_11, %c0_12, %c0_13], %14 {strides = array<i32>} : memref<1x8x512xf32, #tpu.memory_space<vmem>>, vector<1x8x512xf32>,
    return
  }
  func.func @transform_0(%arg0: i32, %arg1: i32) -> (i32, i32, i32) {
    %c0_i32 = arith.constant 0 : i32
    %c0_i32_0 = arith.constant 0 : i32
    return %arg1, %c0_i32, %arg0 : i32, i32, i32
  }
  func.func @transform_1(%arg0: i32, %arg1: i32) -> (i32, i32) {
    %c0_i32 = arith.constant 0 : i32
    %c0_i32_0 = arith.constant 0 : i32
    %c0_i32_1 = arith.constant 0 : i32
    return %c0_i32, %c0_i32_0 : i32, i32
  }
  func.func @transform_2(%arg0: i32, %arg1: i32) -> (i32, i32) {
    %c0_i32 = arith.constant 0 : i32
    %c0_i32_0 = arith.constant 0 : i32
    %c0_i32_1 = arith.constant 0 : i32
    return %c0_i32, %c0_i32_0 : i32, i32
  }
  func.func @transform_3(%arg0: i32, %arg1: i32) -> (i32, i32) {
    %c0_i32 = arith.constant 0 : i32
    %c0_i32_0 = arith.constant 0 : i32
    %c0_i32_1 = arith.constant 0 : i32
    return %c0_i32, %c0_i32_0 : i32, i32
  }
  func.func @transform_4(%arg0: i32, %arg1: i32) -> (i32, i32) {
    %c0_i32 = arith.constant 0 : i32
    %c0_i32_0 = arith.constant 0 : i32
    %c0_i32_1 = arith.constant 0 : i32
    return %c0_i32, %c0_i32_0 : i32, i32
  }
  func.func @transform_5(%arg0: i32, %arg1: i32) -> (i32, i32, i32) {
    %c0_i32 = arith.constant 0 : i32
    %c0_i32_0 = arith.constant 0 : i32
    return %arg1, %c0_i32, %arg0 : i32, i32, i32
  }
}

</mosaic_0001>

<llo_original>
// kernel: tpu_custom_call.1
$region0: #{tpu_custom_call.1}
  #allocation0 [shape = 'u32[]', space=smem, size = 0x4, offset = 0x4, fixed_abs, tag = 'smem constant byte address 0x4 - core index']
  #allocation1 [shape = 'u32[144,128]{1,0:T(1,128)}', space=vmem, size = 0x12000, scoped, tag = 'internal scratch']
  %s0 = inlined_call_operand.vmem [shape: f32[2,4,512], index: 0, kind: input, shape index: {}]
  %s1 = inlined_call_operand.vmem [shape: f32[32,4], index: 1, kind: input, shape index: {}]
  %s2 = inlined_call_operand.vmem [shape: f32[32,1], index: 2, kind: input, shape index: {}]
  %s3 = inlined_call_operand.vmem [shape: f32[8,32], index: 3, kind: input, shape index: {}]
  %s4 = inlined_call_operand.vmem [shape: f32[8,1], index: 4, kind: input, shape index: {}]
  %s5 = inlined_call_operand.hbm [shape: f32[2,8,512], index: 5, kind: output, shape index: {}]
  %s6 = sld [smem:[#allocation0]]
  $region53: #{tpu_custom_call.1} parent=0
    _
  %s8 = ssub.s32 1, %s6
  %s9 = scalar_select 0, %s8, %s6
  $region1: #{tpu_custom_call.1} parent=0
    #allocation2 [shape = 'u8[32768]{0}', space=vmem, size = 0x8000, scoped, tag = 'output window, operand 0']
    #allocation3 [shape = 's32[2]{0}', space=sflag, size = 0x8, scoped, tag = 'scoped memory for tpu_custom_call.1']
    %10 = vsyncpa [#allocation3], 0
    %s11 = scalar_lea.sflag [#allocation3], 1
    %12 = vsyncpa %s11, 0
    loop: start=0, step=1, limit=4
    $region2: #{tpu_custom_call.1} parent=1 // loop_pre_header
      _
    $region3: #{tpu_custom_call.1} parent=1 // loop_header
      %s14 = sphi 0, %s18
      %p15 = scmp.ge.s32.totalorder %s14, 4
      %s21 = sphi 0, %s33
      %s22 = sphi 0, %s29
      %s23 = sphi 0, %s21
      %s24 = sphi 0, %s22
      %s25 = sphi 0, %s23
      %s26 = sphi 0, %s24
      %s38 = sphi 0, %s40
      %s41 = sphi 0, %s38
      %s42 = sphi 0, %s41
      %s58 = sphi 0, %s42
      %s62 = sphi 0, %s62
      %s64 = sphi 0, %s62
      %s65 = sphi 0, %s64
      %s79 = sphi 0, %s65
      %s83 = sphi 0, %s83
      %s85 = sphi 0, %s83
      %s86 = sphi 0, %s85
      %s100 = sphi 0, %s86
      %s104 = sphi 0, %s104
      %s106 = sphi 0, %s104
      %s107 = sphi 0, %s106
      %s121 = sphi 0, %s107
      %s125 = sphi 0, %s125
      %s127 = sphi 0, %s125
      %s128 = sphi 0, %s127
      %s142 = sphi 0, %s128
      %s150 = sphi 0, %s152
      %s153 = sphi 0, %s150
      %s154 = sphi 0, %s153
      %s170 = sphi 0, %s154
    $region4: #{tpu_custom_call.1} parent=1 // loop_header_branch
      %17 = sbr.rel (%p15) target = $region8
    $region5: #{tpu_custom_call.1} parent=1 // loop_body
      %s19 = ssub.s32 %s14, 1
      %s20 = ssub.s32 %s14, 2
      %s27 = sadd.s32 1, %s22
      %p28 = scmp.ge.s32.totalorder %s27, 2
      %s29 = scalar_select %p28, 0, %s27
      %s30 = sadd.s32 1, %s21
      %s31 = scalar_select %p28, %s30, %s21
      %p32 = scmp.ge.s32.totalorder %s31, 1
      %s33 = scalar_select %p32, 0, %s31
      %s34 = ssub.s32 %s22, %s29
      %s35 = ssub.s32 %s21, %s33
      %s36 = sor.u32 %s34, %s35
      %p37 = scmp.eq.s32.totalorder %s36, 0
      %s39 = sadd.s32 %s38, 1
      %s40 = scalar_select %p37, %s38, %s39
      %p43 = pneg %p37
      %p44 = scmp.eq.s32.totalorder %s14, 1
      %p45 = por %p43, %p44
      %p46 = scmp.ne.s32.totalorder %s38, %s41
      %p47 = scmp.eq.s32.totalorder %s14, 0
      %p48 = por %p46, %p47
      %p49 = scmp.ne.s32.totalorder %s38, %s41
      %p50 = scmp.eq.s32.totalorder %s19, 1
      %p51 = por %p49, %p50
      %p52 = scmp.ne.s32.totalorder %s41, %s42
      %p53 = scmp.eq.s32.totalorder %s19, 0
      %p54 = por %p52, %p53
      %p55 = scmp.ne.s32.totalorder %s41, %s42
      %p56 = scmp.eq.s32.totalorder %s20, 1
      %p57 = por %p55, %p56
      %p59 = scmp.ne.s32.totalorder %s42, %s58
      %p60 = scmp.eq.s32.totalorder %s20, 0
      %p61 = por %p59, %p60
      %s63 = sadd.s32 %s62, 1
      %p66 = scmp.eq.s32.totalorder %s14, 1
      %p67 = scmp.ne.s32.totalorder %s62, %s64
      %p68 = scmp.eq.s32.totalorder %s14, 0
      %p69 = por %p67, %p68
      %p70 = scmp.ne.s32.totalorder %s62, %s64
      %p71 = scmp.eq.s32.totalorder %s19, 1
      %p72 = por %p70, %p71
      %p73 = scmp.ne.s32.totalorder %s64, %s65
      %p74 = scmp.eq.s32.totalorder %s19, 0
      %p75 = por %p73, %p74
      %p76 = scmp.ne.s32.totalorder %s64, %s65
      %p77 = scmp.eq.s32.totalorder %s20, 1
      %p78 = por %p76, %p77
      %p80 = scmp.ne.s32.totalorder %s65, %s79
      %p81 = scmp.eq.s32.totalorder %s20, 0
      %p82 = por %p80, %p81
      %s84 = sadd.s32 %s83, 1
      %p87 = scmp.eq.s32.totalorder %s14, 1
      %p88 = scmp.ne.s32.totalorder %s83, %s85
      %p89 = scmp.eq.s32.totalorder %s14, 0
      %p90 = por %p88, %p89
      %p91 = scmp.ne.s32.totalorder %s83, %s85
      %p92 = scmp.eq.s32.totalorder %s19, 1
      %p93 = por %p91, %p92
      %p94 = scmp.ne.s32.totalorder %s85, %s86
      %p95 = scmp.eq.s32.totalorder %s19, 0
      %p96 = por %p94, %p95
      %p97 = scmp.ne.s32.totalorder %s85, %s86
      %p98 = scmp.eq.s32.totalorder %s20, 1
      %p99 = por %p97, %p98
      %p101 = scmp.ne.s32.totalorder %s86, %s100
      %p102 = scmp.eq.s32.totalorder %s20, 0
      %p103 = por %p101, %p102
      %s105 = sadd.s32 %s104, 1
      %p108 = scmp.eq.s32.totalorder %s14, 1
      %p109 = scmp.ne.s32.totalorder %s104, %s106
      %p110 = scmp.eq.s32.totalorder %s14, 0
      %p111 = por %p109, %p110
      %p112 = scmp.ne.s32.totalorder %s104, %s106
      %p113 = scmp.eq.s32.totalorder %s19, 1
      %p114 = por %p112, %p113
      %p115 = scmp.ne.s32.totalorder %s106, %s107
      %p116 = scmp.eq.s32.totalorder %s19, 0
      %p117 = por %p115, %p116
      %p118 = scmp.ne.s32.totalorder %s106, %s107
      %p119 = scmp.eq.s32.totalorder %s20, 1
      %p120 = por %p118, %p119
      %p122 = scmp.ne.s32.totalorder %s107, %s121
      %p123 = scmp.eq.s32.totalorder %s20, 0
      %p124 = por %p122, %p123
      %s126 = sadd.s32 %s125, 1
      %p129 = scmp.eq.s32.totalorder %s14, 1
      %p130 = scmp.ne.s32.totalorder %s125, %s127
      %p131 = scmp.eq.s32.totalorder %s14, 0
      %p132 = por %p130, %p131
      %p133 = scmp.ne.s32.totalorder %s125, %s127
      %p134 = scmp.eq.s32.totalorder %s19, 1
      %p135 = por %p133, %p134
      %p136 = scmp.ne.s32.totalorder %s127, %s128
      %p137 = scmp.eq.s32.totalorder %s19, 0
      %p138 = por %p136, %p137
      %p139 = scmp.ne.s32.totalorder %s127, %s128
      %p140 = scmp.eq.s32.totalorder %s20, 1
      %p141 = por %p139, %p140
      %p143 = scmp.ne.s32.totalorder %s128, %s142
      %p144 = scmp.eq.s32.totalorder %s20, 0
      %p145 = por %p143, %p144
      %s146 = ssub.s32 %s22, %s29
      %s147 = ssub.s32 %s21, %s33
      %s148 = sor.u32 %s146, %s147
      %p149 = scmp.eq.s32.totalorder %s148, 0
      %s151 = sadd.s32 %s150, 1
      %s152 = scalar_select %p149, %s150, %s151
      %p155 = pneg %p149
      %p156 = scmp.eq.s32.totalorder %s14, 1
      %p157 = por %p155, %p156
      %p158 = scmp.ne.s32.totalorder %s150, %s153
      %p159 = scmp.eq.s32.totalorder %s14, 0
      %p160 = por %p158, %p159
      %p161 = scmp.ne.s32.totalorder %s150, %s153
      %p162 = scmp.eq.s32.totalorder %s19, 1
      %p163 = por %p161, %p162
      %p164 = scmp.ne.s32.totalorder %s153, %s154
      %p165 = scmp.eq.s32.totalorder %s19, 0
      %p166 = por %p164, %p165
      %p167 = scmp.ne.s32.totalorder %s153, %s154
      %p168 = scmp.eq.s32.totalorder %s20, 1
      %p169 = por %p167, %p168
      %p171 = scmp.ne.s32.totalorder %s154, %s170
      %p172 = scmp.eq.s32.totalorder %s20, 0
      %p173 = por %p171, %p172
      %p174 = scmp.le.s32.totalorder 1, %s14
      %p175 = scmp.lt.s32.totalorder %s14, 3
      %p176 = pnand %p174, %p175
      %p177 = pneg %p176
      // Predicated region
      $region9: #{tpu_custom_call.1} parent=5 // pred_check
        _
      $region10: #{tpu_custom_call.1} parent=5 // pred_check_branch
        %179 = sbr.rel (%p176) target = $region12
      $region11: #{tpu_custom_call.1} parent=5 // pred_region
        %s180 = ssub.s32 %s14, 1
        // Predicated region
        $region13: #{tpu_custom_call.1} parent=11 // pred_check
          %p181 = pneg %p75
        $region14: #{tpu_custom_call.1} parent=11 // pred_check_branch
          %183 = sbr.rel (%p181) target = $region16
        $region15: #{tpu_custom_call.1} parent=11 // pred_region
          _
        $region16: #{tpu_custom_call.1} parent=11 // pred_fallthru
          _
        // Predicated region
        $region17: #{tpu_custom_call.1} parent=11 // pred_check
          %p184 = pneg %p96
        $region18: #{tpu_custom_call.1} parent=11 // pred_check_branch
          %186 = sbr.rel (%p184) target = $region20
        $region19: #{tpu_custom_call.1} parent=11 // pred_region
          _
        $region20: #{tpu_custom_call.1} parent=11 // pred_fallthru
          _
        // Predicated region
        $region21: #{tpu_custom_call.1} parent=11 // pred_check
          %p187 = pneg %p117
        $region22: #{tpu_custom_call.1} parent=11 // pred_check_branch
          %189 = sbr.rel (%p187) target = $region24
        $region23: #{tpu_custom_call.1} parent=11 // pred_region
          _
        $region24: #{tpu_custom_call.1} parent=11 // pred_fallthru
          _
        // Predicated region
        $region25: #{tpu_custom_call.1} parent=11 // pred_check
          %p190 = pneg %p138
        $region26: #{tpu_custom_call.1} parent=11 // pred_check_branch
          %192 = sbr.rel (%p190) target = $region28
        $region27: #{tpu_custom_call.1} parent=11 // pred_region
          _
        $region28: #{tpu_custom_call.1} parent=11 // pred_fallthru
          _
      $region12: #{tpu_custom_call.1} parent=5 // pred_fallthru
        _
      %p193 = scmp.lt.s32.totalorder %s14, 2
      // Predicated region
      $region29: #{tpu_custom_call.1} parent=5 // pred_check
        %p194 = pneg %p193
      $region30: #{tpu_custom_call.1} parent=5 // pred_check_branch
        %196 = sbr.rel (%p194) target = $region32
      $region31: #{tpu_custom_call.1} parent=5 // pred_region
        // Predicated region
        $region33: #{tpu_custom_call.1} parent=31 // pred_check
          %p197 = pneg %p48
        $region34: #{tpu_custom_call.1} parent=31 // pred_check_branch
          %199 = sbr.rel (%p197) target = $region36
        $region35: #{tpu_custom_call.1} parent=31 // pred_region
          %s200 = smul.u32 4, %s21
          %p201 = scmp.lt.s32.totalorder %s22, 1
          %s202 = scalar_select %p201, %s22, 1
          %p203 = scmp.lt.s32.totalorder %s200, 3
          %s204 = scalar_select %p203, %s200, 3
          %s205 = smul.addr %s202, 4
          %s206 = sadd.s32 %s204, %s205
          %s207 = smul.addr %s206, 4
          %s208 = scalar_lea.vmem %s0, %s207
          %s209 = smul.u32 4, %s21
        $region36: #{tpu_custom_call.1} parent=31 // pred_fallthru
          _
      $region32: #{tpu_custom_call.1} parent=5 // pred_fallthru
        _
      %p210 = scmp.le.s32.totalorder 1, %s14
      %p211 = scmp.lt.s32.totalorder %s14, 3
      %p212 = pnand %p210, %p211
      %p213 = pneg %p212
      // Predicated region
      $region37: #{tpu_custom_call.1} parent=5 // pred_check
        _
      $region38: #{tpu_custom_call.1} parent=5 // pred_check_branch
        %215 = sbr.rel (%p212) target = $region40
      $region39: #{tpu_custom_call.1} parent=5 // pred_region
        %s216 = ssub.s32 %s14, 1
        %s217 = smul.u32 4, %s23
        %p218 = scmp.lt.s32.totalorder %s24, 1
        %s219 = scalar_select %p218, %s24, 1
        %p220 = scmp.lt.s32.totalorder %s217, 3
        %s221 = scalar_select %p220, %s217, 3
        %s222 = smul.addr %s219, 4
        %s223 = sadd.s32 %s221, %s222
        %s224 = smul.addr %s223, 4
        %s225 = scalar_lea.vmem %s0, %s224
        %p226 = pneg %p54
        %p227 = pneg %p51
        %p228 = pneg %p75
        %p229 = pneg %p72
        %p230 = pneg %p96
        %p231 = pneg %p93
        %p232 = pneg %p117
        %p233 = pneg %p114
        %p234 = pneg %p138
        %p235 = pneg %p135
        %p236 = pneg %p166
        %p237 = pneg %p163
        %s238 = sand.u32 %s153, 1
        %s239 = scalar_lea.sflag [#allocation3], %s238
        %s240 = sand.u32 %s153, 1
        %s241 = smul.addr %s240, 32
        %s242 = scalar_lea.vmem [#allocation2], %s241
        %s243 = smul.u32 4, %s23
        %p244 = scmp.lt.s32.totalorder %s24, 1
        %s245 = scalar_select %p244, %s24, 1
        %p246 = scmp.lt.s32.totalorder %s243, 3
        %s247 = scalar_select %p246, %s243, 3
        %s248 = smul.addr %s245, 4
        %s249 = sadd.s32 %s247, %s248
        %s250 = smul.addr %s249, 4
        %s251 = scalar_lea.vmem %s0, %s250
        %s252 = smul.u32 4, %s23
        %s253 = smul.u32 4, %s23
        %v254 = vld [vmem:[%s1] sm:$0xff]
        %v255 = vld [vmem:[%s1 + $0x8] sm:$0xff]
        %v256 = vld [vmem:[%s1 + $0x10] sm:$0xff]
        %v257 = vld [vmem:[%s1 + $0x18] sm:$0xff]
        %v258 = vld [vmem:[%s2] sm:$0xff]
        %v259 = vld [vmem:[%s2 + $0x8] sm:$0xff]
        %v260 = vld [vmem:[%s2 + $0x10] sm:$0xff]
        %v261 = vld [vmem:[%s2 + $0x18] sm:$0xff]
        %v262 = vld [vmem:[%s3] sm:$0xff]
        %v263 = vld [vmem:[%s4] sm:$0xff]
        %v264 = vld [vmem:[%s251] sm:$0xff]
        %v265 = vld [vmem:[%s251 + $0x8] sm:$0xff]
        %267 = vset.pattern.permute.xlu0 0
        %268 = vperm.xlu0 %267, %v258
        %v269 = vpop.permute.xlu0 %268
        %272 = vset.pattern.permute.xlu0 0
        %273 = vperm.xlu0 %272, %v259
        %v274 = vpop.permute.xlu0 %273
        %277 = vset.pattern.permute.xlu0 0
        %278 = vperm.xlu0 %277, %v260
        %v279 = vpop.permute.xlu0 %278
        %282 = vset.pattern.permute.xlu0 0
        %283 = vperm.xlu0 %282, %v261
        %v284 = vpop.permute.xlu0 %283
        %v288 = vcombine.high %v264, %v264
        %v289 = vcombine.high %v265, %v265
        %vm290 = vcmask 31744
        %v292 = vsel %vm290, %v254, 0
        %v295 = vsel %vm290, %v255, 0
        %v298 = vsel %vm290, %v256, 0
        %v301 = vsel %vm290, %v257, 0
        %vm303 = vcmask 1043456
        %v304 = vsel %vm303, %v264, 0
        %v306 = vsel %vm303, %v288, 0
        %v308 = vsel %vm303, %v265, 0
        %v310 = vsel %vm303, %v289, 0
        %312 = vmatprep.subr.mxu0 0.0
        %313 = vmatpush1.msra.mxu0 0.0
        %314 = vmatprep.subr.mxu0 0.0
        %315 = vmatpush1.msra.mxu0 0.0
        %316 = vmatprep.subr.mxu0 0.0
        %317 = vmatpush1.msra.mxu0 0.0
        %318 = vmatprep.subr.mxu0 0.0
        %319 = vmatpush1.msra.mxu0 0.0
        %320 = vmatprep.subr.mxu0 0.0
        %321 = vmatpush1.msra.mxu0 0.0
        %322 = vmatprep.subr.mxu0 0.0
        %323 = vmatpush1.msra.mxu0 0.0
        %324 = vmatprep.subr.mxu0 0.0
        %325 = vmatpush1.msra.mxu0 0.0
        %326 = vmatprep.subr.mxu0 0.0
        %327 = vmatpush1.msra.mxu0 0.0
        %328 = vmatprep.subr.mxu0 0.0
        %329 = vmatpush1.msra.mxu0 0.0
        %330 = vmatprep.subr.mxu0 0.0
        %331 = vmatpush1.msra.mxu0 0.0
        %332 = vmatprep.subr.mxu0 0.0
        %333 = vmatpush1.msra.mxu0 0.0
        %334 = vmatprep.subr.mxu0 0.0
        %335 = vmatpush1.msra.mxu0 0.0
        %336 = vmatprep.subr.mxu0 0.0
        %337 = vmatpush1.msra.mxu0 0.0
        %338 = vmatprep.subr.mxu0 0.0
        %339 = vmatpush1.msra.mxu0 0.0
        %340 = vmatprep.subr.mxu0 0.0
        %341 = vmatpush1.msra.mxu0 0.0
        %342 = vmatprep.subr.mxu0 %v306
        %343 = vmatpush1.msra.mxu0 %v304
        %344 = vmatprep.subr.mxu0 0.0
        %345 = vmatpush2.msra.mxu0 0.0
        %346 = vmatprep.subr.mxu0 0.0
        %347 = vmatpush2.msra.mxu0 0.0
        %348 = vmatprep.subr.mxu0 0.0
        %349 = vmatpush2.msra.mxu0 0.0
        %350 = vmatprep.subr.mxu0 0.0
        %351 = vmatpush2.msra.mxu0 0.0
        %352 = vmatprep.subr.mxu0 0.0
        %353 = vmatpush2.msra.mxu0 0.0
        %354 = vmatprep.subr.mxu0 0.0
        %355 = vmatpush2.msra.mxu0 0.0
        %356 = vmatprep.subr.mxu0 0.0
        %357 = vmatpush2.msra.mxu0 0.0
        %358 = vmatprep.subr.mxu0 0.0
        %359 = vmatpush2.msra.mxu0 0.0
        %360 = vmatprep.subr.mxu0 0.0
        %361 = vmatpush2.msra.mxu0 0.0
        %362 = vmatprep.subr.mxu0 0.0
        %363 = vmatpush2.msra.mxu0 0.0
        %364 = vmatprep.subr.mxu0 0.0
        %365 = vmatpush2.msra.mxu0 0.0
        %366 = vmatprep.subr.mxu0 0.0
        %367 = vmatpush2.msra.mxu0 0.0
        %368 = vmatprep.subr.mxu0 0.0
        %369 = vmatpush2.msra.mxu0 0.0
        %370 = vmatprep.subr.mxu0 0.0
        %371 = vmatpush2.msra.mxu0 0.0
        %372 = vmatprep.subr.mxu0 0.0
        %373 = vmatpush2.msra.mxu0 0.0
        %374 = vmatprep.subr.mxu0 0.0
        %375 = vmatpush2.msra.mxu0 0.0
        %376 = vmatprep.mubr.f32.mxu0 0.0
        %377 = vmatmul.mubr.f32.gmra.mxu0 %v292
        %v378 = vpop.f32.mrf.mxu0
        %v379 = vadd.f32 %v269, %v378
        %v380 = vpop.f32.mrf.mxu0
        %v381 = vadd.f32 %v269, %v380
        %382 = vmatprep.mubr.f32.mxu0 0.0
        %383 = vmatmul.mubr.f32.gmra.mxu0 %v295
        %v384 = vpop.f32.mrf.mxu0
        %v385 = vadd.f32 %v274, %v384
        %v386 = vpop.f32.mrf.mxu0
        %v387 = vadd.f32 %v274, %v386
        %388 = vmatprep.mubr.f32.mxu0 0.0
        %389 = vmatmul.mubr.f32.gmra.mxu0 %v298
        %v390 = vpop.f32.mrf.mxu0
        %v391 = vadd.f32 %v279, %v390
        %v392 = vpop.f32.mrf.mxu0
        %v393 = vadd.f32 %v279, %v392
        %394 = vmatprep.mubr.f32.mxu0 0.0
        %395 = vmatmul.mubr.f32.gmra.mxu0 %v301
        %v396 = vpop.f32.mrf.mxu0
        %v397 = vadd.f32 %v284, %v396
        %v398 = vpop.f32.mrf.mxu0
        %v399 = vadd.f32 %v284, %v398
        %400 = vdwg.mxu0
        %401 = vmatprep.subr.mxu0 0.0
        %402 = vmatpush1.msra.mxu0 0.0
        %403 = vmatprep.subr.mxu0 0.0
        %404 = vmatpush1.msra.mxu0 0.0
        %405 = vmatprep.subr.mxu0 0.0
        %406 = vmatpush1.msra.mxu0 0.0
        %407 = vmatprep.subr.mxu0 0.0
        %408 = vmatpush1.msra.mxu0 0.0
        %409 = vmatprep.subr.mxu0 0.0
        %410 = vmatpush1.msra.mxu0 0.0
        %411 = vmatprep.subr.mxu0 0.0
        %412 = vmatpush1.msra.mxu0 0.0
        %413 = vmatprep.subr.mxu0 0.0
        %414 = vmatpush1.msra.mxu0 0.0
        %415 = vmatprep.subr.mxu0 0.0
        %416 = vmatpush1.msra.mxu0 0.0
        %417 = vmatprep.subr.mxu0 0.0
        %418 = vmatpush1.msra.mxu0 0.0
        %419 = vmatprep.subr.mxu0 0.0
        %420 = vmatpush1.msra.mxu0 0.0
        %421 = vmatprep.subr.mxu0 0.0
        %422 = vmatpush1.msra.mxu0 0.0
        %423 = vmatprep.subr.mxu0 0.0
        %424 = vmatpush1.msra.mxu0 0.0
        %425 = vmatprep.subr.mxu0 0.0
        %426 = vmatpush1.msra.mxu0 0.0
        %427 = vmatprep.subr.mxu0 0.0
        %428 = vmatpush1.msra.mxu0 0.0
        %429 = vmatprep.subr.mxu0 0.0
        %430 = vmatpush1.msra.mxu0 0.0
        %431 = vmatprep.subr.mxu0 %v310
        %432 = vmatpush1.msra.mxu0 %v308
        %433 = vmatprep.subr.mxu0 0.0
        %434 = vmatpush2.msra.mxu0 0.0
        %435 = vmatprep.subr.mxu0 0.0
        %436 = vmatpush2.msra.mxu0 0.0
        %437 = vmatprep.subr.mxu0 0.0
        %438 = vmatpush2.msra.mxu0 0.0
        %439 = vmatprep.subr.mxu0 0.0
        %440 = vmatpush2.msra.mxu0 0.0
        %441 = vmatprep.subr.mxu0 0.0
        %442 = vmatpush2.msra.mxu0 0.0
        %443 = vmatprep.subr.mxu0 0.0
        %444 = vmatpush2.msra.mxu0 0.0
        %445 = vmatprep.subr.mxu0 0.0
        %446 = vmatpush2.msra.mxu0 0.0
        %447 = vmatprep.subr.mxu0 0.0
        %448 = vmatpush2.msra.mxu0 0.0
        %449 = vmatprep.subr.mxu0 0.0
        %450 = vmatpush2.msra.mxu0 0.0
        %451 = vmatprep.subr.mxu0 0.0
        %452 = vmatpush2.msra.mxu0 0.0
        %453 = vmatprep.subr.mxu0 0.0
        %454 = vmatpush2.msra.mxu0 0.0
        %455 = vmatprep.subr.mxu0 0.0
        %456 = vmatpush2.msra.mxu0 0.0
        %457 = vmatprep.subr.mxu0 0.0
        %458 = vmatpush2.msra.mxu0 0.0
        %459 = vmatprep.subr.mxu0 0.0
        %460 = vmatpush2.msra.mxu0 0.0
        %461 = vmatprep.subr.mxu0 0.0
        %462 = vmatpush2.msra.mxu0 0.0
        %463 = vmatprep.subr.mxu0 0.0
        %464 = vmatpush2.msra.mxu0 0.0
        %465 = vmatprep.mubr.f32.mxu0 0.0
        %466 = vmatmul.mubr.f32.gmra.mxu0 %v292
        %v467 = vpop.f32.mrf.mxu0
        %v468 = vadd.f32 %v269, %v467
        %v469 = vpop.f32.mrf.mxu0
        %v470 = vadd.f32 %v269, %v469
        %471 = vmatprep.mubr.f32.mxu0 0.0
        %472 = vmatmul.mubr.f32.gmra.mxu0 %v295
        %v473 = vpop.f32.mrf.mxu0
        %v474 = vadd.f32 %v274, %v473
        %v475 = vpop.f32.mrf.mxu0
        %v476 = vadd.f32 %v274, %v475
        %477 = vmatprep.mubr.f32.mxu0 0.0
        %478 = vmatmul.mubr.f32.gmra.mxu0 %v298
        %v479 = vpop.f32.mrf.mxu0
        %v480 = vadd.f32 %v279, %v479
        %v481 = vpop.f32.mrf.mxu0
        %v482 = vadd.f32 %v279, %v481
        %483 = vmatprep.mubr.f32.mxu0 0.0
        %484 = vmatmul.mubr.f32.gmra.mxu0 %v301
        %v485 = vpop.f32.mrf.mxu0
        %v486 = vadd.f32 %v284, %v485
        %v487 = vpop.f32.mrf.mxu0
        %v488 = vadd.f32 %v284, %v487
        %489 = vdwg.mxu0
        %491 = vset.pattern.permute.xlu0 0
        %492 = vperm.xlu0 %491, %v263
        %v493 = vpop.permute.xlu0 %492
        %vm495 = vcmask 261120
        %v497 = vsel %vm495, %v262, 0
        %499 = vmatprep.subr.mxu0 0.0
        %500 = vmatpush1.msra.mxu0 0.0
        %501 = vmatprep.subr.mxu0 0.0
        %502 = vmatpush1.msra.mxu0 0.0
        %503 = vmatprep.subr.mxu0 0.0
        %504 = vmatpush1.msra.mxu0 0.0
        %505 = vmatprep.subr.mxu0 0.0
        %506 = vmatpush1.msra.mxu0 0.0
        %507 = vmatprep.subr.mxu0 0.0
        %508 = vmatpush1.msra.mxu0 0.0
        %509 = vmatprep.subr.mxu0 0.0
        %510 = vmatpush1.msra.mxu0 0.0
        %511 = vmatprep.subr.mxu0 0.0
        %512 = vmatpush1.msra.mxu0 0.0
        %513 = vmatprep.subr.mxu0 0.0
        %514 = vmatpush1.msra.mxu0 0.0
        %515 = vmatprep.subr.mxu0 0.0
        %516 = vmatpush1.msra.mxu0 0.0
        %517 = vmatprep.subr.mxu0 0.0
        %518 = vmatpush1.msra.mxu0 0.0
        %519 = vmatprep.subr.mxu0 0.0
        %520 = vmatpush1.msra.mxu0 0.0
        %521 = vmatprep.subr.mxu0 0.0
        %522 = vmatpush1.msra.mxu0 0.0
        %523 = vmatprep.subr.mxu0 %v399
        %524 = vmatpush1.msra.mxu0 %v397
        %525 = vmatprep.subr.mxu0 %v393
        %526 = vmatpush1.msra.mxu0 %v391
        %527 = vmatprep.subr.mxu0 %v387
        %528 = vmatpush1.msra.mxu0 %v385
        %529 = vmatprep.subr.mxu0 %v381
        %530 = vmatpush1.msra.mxu0 %v379
        %531 = vmatprep.subr.mxu0 0.0
        %532 = vmatpush2.msra.mxu0 0.0
        %533 = vmatprep.subr.mxu0 0.0
        %534 = vmatpush2.msra.mxu0 0.0
        %535 = vmatprep.subr.mxu0 0.0
        %536 = vmatpush2.msra.mxu0 0.0
        %537 = vmatprep.subr.mxu0 0.0
        %538 = vmatpush2.msra.mxu0 0.0
        %539 = vmatprep.subr.mxu0 0.0
        %540 = vmatpush2.msra.mxu0 0.0
        %541 = vmatprep.subr.mxu0 0.0
        %542 = vmatpush2.msra.mxu0 0.0
        %543 = vmatprep.subr.mxu0 0.0
        %544 = vmatpush2.msra.mxu0 0.0
        %545 = vmatprep.subr.mxu0 0.0
        %546 = vmatpush2.msra.mxu0 0.0
        %547 = vmatprep.subr.mxu0 0.0
        %548 = vmatpush2.msra.mxu0 0.0
        %549 = vmatprep.subr.mxu0 0.0
        %550 = vmatpush2.msra.mxu0 0.0
        %551 = vmatprep.subr.mxu0 0.0
        %552 = vmatpush2.msra.mxu0 0.0
        %553 = vmatprep.subr.mxu0 0.0
        %554 = vmatpush2.msra.mxu0 0.0
        %555 = vmatprep.subr.mxu0 0.0
        %556 = vmatpush2.msra.mxu0 0.0
        %557 = vmatprep.subr.mxu0 0.0
        %558 = vmatpush2.msra.mxu0 0.0
        %559 = vmatprep.subr.mxu0 0.0
        %560 = vmatpush2.msra.mxu0 0.0
        %561 = vmatprep.subr.mxu0 0.0
        %562 = vmatpush2.msra.mxu0 0.0
        %563 = vmatprep.mubr.f32.mxu0 0.0
        %564 = vmatmul.mubr.f32.gmra.mxu0 %v497
        %v565 = vpop.f32.mrf.mxu0
        %v566 = vadd.f32 %v493, %v565
        %v567 = vpop.f32.mrf.mxu0
        %v568 = vadd.f32 %v493, %v567
        %569 = vdwg.mxu0
        %570 = vmatprep.subr.mxu0 0.0
        %571 = vmatpush1.msra.mxu0 0.0
        %572 = vmatprep.subr.mxu0 0.0
        %573 = vmatpush1.msra.mxu0 0.0
        %574 = vmatprep.subr.mxu0 0.0
        %575 = vmatpush1.msra.mxu0 0.0
        %576 = vmatprep.subr.mxu0 0.0
        %577 = vmatpush1.msra.mxu0 0.0
        %578 = vmatprep.subr.mxu0 0.0
        %579 = vmatpush1.msra.mxu0 0.0
        %580 = vmatprep.subr.mxu0 0.0
        %581 = vmatpush1.msra.mxu0 0.0
        %582 = vmatprep.subr.mxu0 0.0
        %583 = vmatpush1.msra.mxu0 0.0
        %584 = vmatprep.subr.mxu0 0.0
        %585 = vmatpush1.msra.mxu0 0.0
        %586 = vmatprep.subr.mxu0 0.0
        %587 = vmatpush1.msra.mxu0 0.0
        %588 = vmatprep.subr.mxu0 0.0
        %589 = vmatpush1.msra.mxu0 0.0
        %590 = vmatprep.subr.mxu0 0.0
        %591 = vmatpush1.msra.mxu0 0.0
        %592 = vmatprep.subr.mxu0 0.0
        %593 = vmatpush1.msra.mxu0 0.0
        %594 = vmatprep.subr.mxu0 %v488
        %595 = vmatpush1.msra.mxu0 %v486
        %596 = vmatprep.subr.mxu0 %v482
        %597 = vmatpush1.msra.mxu0 %v480
        %598 = vmatprep.subr.mxu0 %v476
        %599 = vmatpush1.msra.mxu0 %v474
        %600 = vmatprep.subr.mxu0 %v470
        %601 = vmatpush1.msra.mxu0 %v468
        %602 = vmatprep.subr.mxu0 0.0
        %603 = vmatpush2.msra.mxu0 0.0
        %604 = vmatprep.subr.mxu0 0.0
        %605 = vmatpush2.msra.mxu0 0.0
        %606 = vmatprep.subr.mxu0 0.0
        %607 = vmatpush2.msra.mxu0 0.0
        %608 = vmatprep.subr.mxu0 0.0
        %609 = vmatpush2.msra.mxu0 0.0
        %610 = vmatprep.subr.mxu0 0.0
        %611 = vmatpush2.msra.mxu0 0.0
        %612 = vmatprep.subr.mxu0 0.0
        %613 = vmatpush2.msra.mxu0 0.0
        %614 = vmatprep.subr.mxu0 0.0
        %615 = vmatpush2.msra.mxu0 0.0
        %616 = vmatprep.subr.mxu0 0.0
        %617 = vmatpush2.msra.mxu0 0.0
        %618 = vmatprep.subr.mxu0 0.0
        %619 = vmatpush2.msra.mxu0 0.0
        %620 = vmatprep.subr.mxu0 0.0
        %621 = vmatpush2.msra.mxu0 0.0
        %622 = vmatprep.subr.mxu0 0.0
        %623 = vmatpush2.msra.mxu0 0.0
        %624 = vmatprep.subr.mxu0 0.0
        %625 = vmatpush2.msra.mxu0 0.0
        %626 = vmatprep.subr.mxu0 0.0
        %627 = vmatpush2.msra.mxu0 0.0
        %628 = vmatprep.subr.mxu0 0.0
        %629 = vmatpush2.msra.mxu0 0.0
        %630 = vmatprep.subr.mxu0 0.0
        %631 = vmatpush2.msra.mxu0 0.0
        %632 = vmatprep.subr.mxu0 0.0
        %633 = vmatpush2.msra.mxu0 0.0
        %634 = vmatprep.mubr.f32.mxu0 0.0
        %635 = vmatmul.mubr.f32.gmra.mxu0 %v497
        %v636 = vpop.f32.mrf.mxu0
        %v637 = vadd.f32 %v493, %v636
        %v638 = vpop.f32.mrf.mxu0
        %v639 = vadd.f32 %v493, %v638
        %640 = vdwg.mxu0
        %641 = vst [vmem:[%s242] sm:$0xff] %v566
        %642 = vst [vmem:[%s242 + $0x8] sm:$0xff] %v568
        %643 = vst [vmem:[%s242 + $0x10] sm:$0xff] %v637
        %644 = vst [vmem:[%s242 + $0x18] sm:$0xff] %v639
        %s645 = sand.u32 %s153, 1
        %s646 = scalar_lea.sflag [#allocation3], %s645
        %s647 = sand.u32 %s153, 1
        %s648 = smul.addr %s647, 32
        %s649 = scalar_lea.vmem [#allocation2], %s648
        // Predicated region
        $region41: #{tpu_custom_call.1} parent=39 // pred_check
          %p650 = pneg %p163
        $region42: #{tpu_custom_call.1} parent=39 // pred_check_branch
          %652 = sbr.rel (%p650) target = $region44
        $region43: #{tpu_custom_call.1} parent=39 // pred_region
          %s653 = smul.u32 4, %s23
          %s655 = ssub.s32 512, 512
          %656 = vsyncadd %s646, %s655
          %s657 = smul.addr %s24, 4
          %s658 = sadd.s32 %s653, %s657
          %s659 = smul.addr %s658, 128
          %s660 = scalar_lea.hbm %s5, %s659
          %s662 = sshll.u32 %s649, 4
          %s663 = int_to_ptr.vmem [resolvable:$true] %s662
          %665 = dma.vmem_to_hbm [thread:$0]  %s663, 512, %s660, %s646
        $region44: #{tpu_custom_call.1} parent=39 // pred_fallthru
          _
      $region40: #{tpu_custom_call.1} parent=5 // pred_fallthru
        _
      %p666 = scmp.le.s32.totalorder 2, %s14
      // Predicated region
      $region45: #{tpu_custom_call.1} parent=5 // pred_check
        %p667 = pneg %p666
      $region46: #{tpu_custom_call.1} parent=5 // pred_check_branch
        %669 = sbr.rel (%p667) target = $region48
      $region47: #{tpu_custom_call.1} parent=5 // pred_region
        %s670 = ssub.s32 %s14, 2
        // Predicated region
        $region49: #{tpu_custom_call.1} parent=47 // pred_check
          %p671 = pneg %p169
        $region50: #{tpu_custom_call.1} parent=47 // pred_check_branch
          %673 = sbr.rel (%p671) target = $region52
        $region51: #{tpu_custom_call.1} parent=47 // pred_region
          %s674 = sand.u32 %s154, 1
          %s675 = scalar_lea.sflag [#allocation3], %s674
          %s676 = sand.u32 %s154, 1
          %s677 = smul.addr %s676, 32
          %s678 = scalar_lea.vmem [#allocation2], %s677
          %679 = dma.done %s675, 512
        $region52: #{tpu_custom_call.1} parent=47 // pred_fallthru
          _
      $region48: #{tpu_custom_call.1} parent=5 // pred_fallthru
        _
    $region6: #{tpu_custom_call.1} parent=1 // loop_footer
      %s18 = sadd.s32 1, %s14
    $region7: #{tpu_custom_call.1} parent=1 // loop_footer_branch
      %13 = sbr.rel target = $region3
    $region8: #{tpu_custom_call.1} parent=1 // loop_exit
      _
    %680 = vsyncpa [#allocation3], 1
    %s681 = scalar_lea.sflag [#allocation3], 1
    %682 = vsyncpa %s681, 1

</llo_original>
